<compile_context>
chip_gen: v6e
topology: v6e:2x2x1
jax: 0.10.0
libtpu: 0.0.40
codegen_flags: <defaults>
</compile_context>

<pallas_src>
import jax
import jax.numpy as jnp
from jax import lax
from jax.experimental import pallas as pl
from jax.experimental.pallas import tpu as pltpu

P_DROP = 0.2
_DROP_THR_24 = int(P_DROP * (1 << 24))   # keep iff 24-bit uniform >= threshold
_INV_KEEP = 1.0 / (1.0 - P_DROP)


def mlp2_kernel(seed_ref, x_ref, w1_ref, b1_ref, w2_ref, b2_ref, o_ref):
    tb = x_ref.shape[0]

    # ---- linear1 (bf16 MXU matmul, f32 accumulate) + bias + ReLU ----
    h = jnp.dot(x_ref[...], w1_ref[...], preferred_element_type=jnp.float32)
    h = h + b1_ref[...]                      # (1, 48) broadcast
    h = jnp.maximum(h, 0.0)

    # ---- dropout(p=0.2), training-mode semantics (inverted dropout) ----
    # Counter-based hash PRNG (pure VPU integer ops), keyed on the *global*
    # element index so every batch tile of the grid gets an independent mask.
    nh = h.shape[1]
    rows = lax.broadcasted_iota(jnp.int32, h.shape, 0) + pl.program_id(0) * tb
    cols = lax.broadcasted_iota(jnp.int32, h.shape, 1)
    idx = (rows * nh + cols).astype(jnp.uint32)
    z = idx + seed_ref[0].astype(jnp.uint32) * jnp.uint32(0x9E3779B9)
    z = z ^ (z >> 16)
    z = z * jnp.uint32(0x7FEB352D)
    z = z ^ (z >> 15)
    z = z * jnp.uint32(0x846CA68B)
    z = z ^ (z >> 16)
    u24 = (z >> 8).astype(jnp.int32)         # uniform integer in [0, 2^24)
    keep = u24 >= _DROP_THR_24
    h = jnp.where(keep, h * _INV_KEEP, 0.0)

    # ---- linear2 ----
    h = h.astype(w2_ref.dtype)
    out = jnp.dot(h, w2_ref[...], preferred_element_type=jnp.float32)
    out = out + b2_ref[...]                  # (1, 10) broadcast
    o_ref[...] = out.astype(o_ref.dtype)


def mlp2_forward(x, w1, b1, w2, b2, seed=0, block_batch=1024):
    """x: (B, 784) f32; w1: (784, 48); b1: (48,)|(1,48); w2: (48, 10); b2: (10,)|(1,10)."""
    B, D_in = x.shape
    D_h = w1.shape[1]
    D_out = w2.shape[1]

    # bf16 for the streamed operand and the weights (MXU-native), f32 biases.
    x_lp = x.astype(jnp.bfloat16)
    w1_lp = w1.astype(jnp.bfloat16)
    w2_lp = w2.astype(jnp.bfloat16)
    b1_f = b1.astype(jnp.float32).reshape(1, D_h)
    b2_f = b2.astype(jnp.float32).reshape(1, D_out)

    # Batch tile: big blocks amortize per-step overhead and reach the HBM
    # roofline; block_batch is a multiple of 8 (f32/bf16 sublane rule).
    tb = B if B <= block_batch else block_batch
    grid = (pl.cdiv(B, tb),)

    seed_arr = jnp.array([seed], dtype=jnp.int32)

    return pl.pallas_call(
        mlp2_kernel,
        out_shape=jax.ShapeDtypeStruct((B, D_out), jnp.float32),
        grid=grid,
        in_specs=[
            pl.BlockSpec(memory_space=pltpu.MemorySpace.SMEM),      # seed (scalar)
            pl.BlockSpec((tb, D_in), lambda i: (i, 0)),             # x: batch-tiled
            pl.BlockSpec((D_in, D_h), lambda i: (0, 0)),            # w1: resident
            pl.BlockSpec((1, D_h), lambda i: (0, 0)),               # b1: resident
            pl.BlockSpec((D_h, D_out), lambda i: (0, 0)),           # w2: resident
            pl.BlockSpec((1, D_out), lambda i: (0, 0)),             # b2: resident
        ],
        out_specs=pl.BlockSpec((tb, D_out), lambda i: (i, 0)),
        compiler_params=pltpu.CompilerParams(
            dimension_semantics=("parallel",),       # shard batch across TCs (v7x)
            vmem_limit_bytes=64 * 1024 * 1024,       # explicit; fits v7x 64 MiB VMEM
        ),
    )(seed_arr, x_lp, w1_lp, b1_f, w2_lp, b2_f)


def init_params(key):
    """Deterministic init mirroring nn.Linear defaults (U(-1/sqrt(fan_in), +))."""
    k1, k2, k3, k4 = jax.random.split(key, 4)
    bound1 = 1.0 / jnp.sqrt(784.0)
    bound2 = 1.0 / jnp.sqrt(48.0)
    w1 = jax.random.uniform(k1, (784, 48), jnp.float32, -bound1, bound1)
    b1 = jax.random.uniform(k2, (1, 48), jnp.float32, -bound1, bound1)
    w2 = jax.random.uniform(k3, (48, 10), jnp.float32, -bound2, bound2)
    b2 = jax.random.uniform(k4, (1, 10), jnp.float32, -bound2, bound2)
    return w1, b1, w2, b2


if __name__ == "__main__":
    key = jax.random.PRNGKey(0)
    k_x, k_p = jax.random.split(key)

    B = 8  # small batch; x is flattened MNIST-style (B, 784)
    x = jax.random.normal(k_x, (B, 784), dtype=jnp.float32)
    w1, b1, w2, b2 = init_params(k_p)

    out = mlp2_forward(x, w1, b1, w2, b2, seed=0)
    jax.block_until_ready(out)

    assert out.shape == (B, 10) and out.dtype == jnp.float32
    assert bool(jnp.all(jnp.isfinite(out)))
    print("KERNEL_OK")
</pallas_src>

<mosaic_0001>
module attributes {stable_mosaic.version = 11 : i64} {
  func.func @mlp2_kernel(%arg0: i32, %arg1: memref<1xi32, #tpu.memory_space<smem>>, %arg2: memref<8x784xbf16, #tpu.memory_space<vmem>>, %arg3: memref<784x48xbf16, #tpu.memory_space<vmem>>, %arg4: memref<1x48xf32, #tpu.memory_space<vmem>>, %arg5: memref<48x10xbf16, #tpu.memory_space<vmem>>, %arg6: memref<1x10xf32, #tpu.memory_space<vmem>>, %arg7: memref<8x10xf32, #tpu.memory_space<vmem>>) attributes {dimension_semantics = [#tpu.dimension_semantics<parallel>], iteration_bounds = array<i64: 1>, scalar_prefetch = 0 : i64, scratch_operands = 0 : i64, tpu.core_type = #tpu.core_type<tc>, window_params = [{transform_indices = @transform_0, window_bounds = array<i64: 1>}, {transform_indices = @transform_1, window_bounds = array<i64: 8, 784>}, {pipeline_mode = #tpu.pipeline_mode<synchronous>, transform_indices = @transform_2, window_bounds = array<i64: 784, 48>}, {pipeline_mode = #tpu.pipeline_mode<synchronous>, transform_indices = @transform_3, window_bounds = array<i64: 1, 48>}, {pipeline_mode = #tpu.pipeline_mode<synchronous>, transform_indices = @transform_4, window_bounds = array<i64: 48, 10>}, {pipeline_mode = #tpu.pipeline_mode<synchronous>, transform_indices = @transform_5, window_bounds = array<i64: 1, 10>}, {transform_indices = @transform_6, window_bounds = array<i64: 8, 10>}]} {
    %c0 = arith.constant 0 : index
    %c0_0 = arith.constant 0 : index
    %0 = vector.load %arg2[%c0, %c0_0] : memref<8x784xbf16, #tpu.memory_space<vmem>>, vector<8x784xbf16>
    %c0_1 = arith.constant 0 : index
    %c0_2 = arith.constant 0 : index
    %1 = vector.load %arg3[%c0_1, %c0_2] : memref<784x48xbf16, #tpu.memory_space<vmem>>, vector<784x48xbf16>
    %cst = arith.constant dense<0.000000e+00> : vector<8x48xf32>
    %2 = tpu.matmul %0, %1, %cst {dimension_numbers = #tpu.dot_dimension_numbers<[1], [0], [0], [1], [0, 0, 1, 1], [], []>} : vector<8x784xbf16>, vector<784x48xbf16>, vector<8x48xf32> -> vector<8x48xf32>
    %c0_3 = arith.constant 0 : index
    %c0_4 = arith.constant 0 : index
    %3 = vector.load %arg4[%c0_3, %c0_4] : memref<1x48xf32, #tpu.memory_space<vmem>>, vector<1x48xf32>
    %4 = vector.broadcast %3 : vector<1x48xf32> to vector<8x48xf32>
    %5 = arith.addf %2, %4 : vector<8x48xf32>
    %cst_5 = arith.constant 0.000000e+00 : f32
    %6 = vector.broadcast %cst_5 : f32 to vector<8x48xf32>
    %7 = arith.maximumf %5, %6 : vector<8x48xf32>
    %8 = tpu.iota {dimensions = array<i32: 0>} : vector<8x48xi32>
    %c8_i32 = arith.constant 8 : i32
    %9 = arith.muli %arg0, %c8_i32 : i32
    %10 = vector.broadcast %9 : i32 to vector<8x48xi32>
    %11 = arith.addi %8, %10 : vector<8x48xi32>
    %12 = tpu.iota {dimensions = array<i32: 1>} : vector<8x48xi32>
    %c48_i32 = arith.constant 48 : i32
    %13 = vector.broadcast %c48_i32 : i32 to vector<8x48xi32>
    %14 = arith.muli %11, %13 : vector<8x48xi32>
    %15 = arith.addi %14, %12 : vector<8x48xi32>
    %c0_6 = arith.constant 0 : index
    %16 = memref.load %arg1[%c0_6] : memref<1xi32, #tpu.memory_space<smem>>
    %c-1640531527_i32 = arith.constant -1640531527 : i32
    %17 = arith.muli %16, %c-1640531527_i32 : i32
    %18 = vector.broadcast %17 : i32 to vector<8x48xi32>
    %19 = arith.addi %15, %18 : vector<8x48xi32>
    %c16_i32 = arith.constant 16 : i32
    %20 = vector.broadcast %c16_i32 : i32 to vector<8x48xi32>
    %21 = arith.shrui %19, %20 : vector<8x48xi32>
    %22 = arith.xori %19, %21 : vector<8x48xi32>
    %c2146121005_i32 = arith.constant 2146121005 : i32
    %23 = vector.broadcast %c2146121005_i32 : i32 to vector<8x48xi32>
    %24 = arith.muli %22, %23 : vector<8x48xi32>
    %c15_i32 = arith.constant 15 : i32
    %25 = vector.broadcast %c15_i32 : i32 to vector<8x48xi32>
    %26 = arith.shrui %24, %25 : vector<8x48xi32>
    %27 = arith.xori %24, %26 : vector<8x48xi32>
    %c-2073254261_i32 = arith.constant -2073254261 : i32
    %28 = vector.broadcast %c-2073254261_i32 : i32 to vector<8x48xi32>
    %29 = arith.muli %27, %28 : vector<8x48xi32>
    %c16_i32_7 = arith.constant 16 : i32
    %30 = vector.broadcast %c16_i32_7 : i32 to vector<8x48xi32>
    %31 = arith.shrui %29, %30 : vector<8x48xi32>
    %32 = arith.xori %29, %31 : vector<8x48xi32>
    %c8_i32_8 = arith.constant 8 : i32
    %33 = vector.broadcast %c8_i32_8 : i32 to vector<8x48xi32>
    %34 = arith.shrui %32, %33 : vector<8x48xi32>
    %c3355443_i32 = arith.constant 3355443 : i32
    %35 = vector.broadcast %c3355443_i32 : i32 to vector<8x48xi32>
    %36 = arith.cmpi sge, %34, %35 : vector<8x48xi32>
    %cst_9 = arith.constant 1.250000e+00 : f32
    %37 = vector.broadcast %cst_9 : f32 to vector<8x48xf32>
    %38 = arith.mulf %7, %37 : vector<8x48xf32>
    %cst_10 = arith.constant 0.000000e+00 : f32
    %39 = vector.broadcast %cst_10 : f32 to vector<8x48xf32>
    %40 = arith.select %36, %38, %39 : vector<8x48xi1>, vector<8x48xf32>
    %41 = arith.truncf %40 : vector<8x48xf32> to vector<8x48xbf16>
    %c0_11 = arith.constant 0 : index
    %c0_12 = arith.constant 0 : index
    %42 = vector.load %arg5[%c0_11, %c0_12] : memref<48x10xbf16, #tpu.memory_space<vmem>>, vector<48x10xbf16>
    %cst_13 = arith.constant dense<0.000000e+00> : vector<8x10xf32>
    %43 = tpu.matmul %41, %42, %cst_13 {dimension_numbers = #tpu.dot_dimension_numbers<[1], [0], [0], [1], [0, 0, 1, 1], [], []>} : vector<8x48xbf16>, vector<48x10xbf16>, vector<8x10xf32> -> vector<8x10xf32>
    %c0_14 = arith.constant 0 : index
    %c0_15 = arith.constant 0 : index
    %44 = vector.load %arg6[%c0_14, %c0_15] : memref<1x10xf32, #tpu.memory_space<vmem>>, vector<1x10xf32>
    %45 = vector.broadcast %44 : vector<1x10xf32> to vector<8x10xf32>
    %46 = arith.addf %43, %45 : vector<8x10xf32>
    %c0_16 = arith.constant 0 : index
    %c0_17 = arith.constant 0 : index
    %47 = vector.load %arg7[%c0_16, %c0_17] : memref<8x10xf32, #tpu.memory_space<vmem>>, vector<8x10xf32>
    tpu.vector_store %arg7[%c0_16, %c0_17], %46 {strides = array<i32>} : memref<8x10xf32, #tpu.memory_space<vmem>>, vector<8x10xf32>,
    return
  }
  func.func @transform_0(%arg0: i32) -> i32 {
    %c0_i32 = arith.constant 0 : i32
    %c0_i32_0 = arith.constant 0 : i32
    return %c0_i32 : i32
  }
  func.func @transform_1(%arg0: i32) -> (i32, i32) {
    %c0_i32 = arith.constant 0 : i32
    %c0_i32_0 = arith.constant 0 : i32
    return %arg0, %c0_i32 : i32, i32
  }
  func.func @transform_2(%arg0: i32) -> (i32, i32) {
    %c0_i32 = arith.constant 0 : i32
    %c0_i32_0 = arith.constant 0 : i32
    %c0_i32_1 = arith.constant 0 : i32
    return %c0_i32, %c0_i32_0 : i32, i32
  }
  func.func @transform_3(%arg0: i32) -> (i32, i32) {
    %c0_i32 = arith.constant 0 : i32
    %c0_i32_0 = arith.constant 0 : i32
    %c0_i32_1 = arith.constant 0 : i32
    return %c0_i32, %c0_i32_0 : i32, i32
  }
  func.func @transform_4(%arg0: i32) -> (i32, i32) {
    %c0_i32 = arith.constant 0 : i32
    %c0_i32_0 = arith.constant 0 : i32
    %c0_i32_1 = arith.constant 0 : i32
    return %c0_i32, %c0_i32_0 : i32, i32
  }
  func.func @transform_5(%arg0: i32) -> (i32, i32) {
    %c0_i32 = arith.constant 0 : i32
    %c0_i32_0 = arith.constant 0 : i32
    %c0_i32_1 = arith.constant 0 : i32
    return %c0_i32, %c0_i32_0 : i32, i32
  }
  func.func @transform_6(%arg0: i32) -> (i32, i32) {
    %c0_i32 = arith.constant 0 : i32
    %c0_i32_0 = arith.constant 0 : i32
    return %arg0, %c0_i32 : i32, i32
  }
}

</mosaic_0001>

<llo_original>
// kernel: tpu_custom_call.1
$region0: #{tpu_custom_call.1}
  #allocation0 [shape = 'u32[]', space=smem, size = 0x4, offset = 0x4, fixed_abs, tag = 'smem constant byte address 0x4 - core index']
  #allocation1 [shape = 'u32[144,128]{1,0:T(1,128)}', space=vmem, size = 0x12000, scoped, tag = 'internal scratch']
  #allocation2 [shape = 's32[1]{0:T(128)S(6)}', space=smem, size = 0x200, scoped, tag = 'scoped memory for tpu_custom_call.1']
  %s0 = inlined_call_operand.<no memory space> [shape: s32[1], index: 0, kind: input, shape index: {}]
  %s1 = inlined_call_operand.vmem [shape: bf16[8,784], index: 1, kind: input, shape index: {}]
  %s2 = inlined_call_operand.vmem [shape: bf16[784,48], index: 2, kind: input, shape index: {}]
  %s3 = inlined_call_operand.vmem [shape: f32[1,48], index: 3, kind: input, shape index: {}]
  %s4 = inlined_call_operand.vmem [shape: bf16[48,10], index: 4, kind: input, shape index: {}]
  %s5 = inlined_call_operand.vmem [shape: f32[1,10], index: 5, kind: input, shape index: {}]
  %s6 = inlined_call_operand.hbm [shape: f32[8,10], index: 6, kind: output, shape index: {}]
  %s7 = sld [smem:[#allocation0]]
  $region34: #{tpu_custom_call.1} parent=0
    _
  %s9 = ssub.s32 1, %s7
  %s10 = scalar_select 0, %s9, %s7
  %11 = sst [smem:[#allocation2]] %s0
  $region1: #{tpu_custom_call.1} parent=0
    #allocation3 [shape = 'u8[4096]{0}', space=vmem, size = 0x1000, scoped, tag = 'output window, operand 0, single buffered']
    #allocation4 [shape = 's32[1]{0}', space=sflag, size = 0x4, scoped, tag = 'scoped memory for tpu_custom_call.1']
    %12 = vsyncpa [#allocation4], 0
    // Predicated region
    $region2: #{tpu_custom_call.1} parent=1 // pred_check
      _
    $region3: #{tpu_custom_call.1} parent=1 // pred_check_branch
      %14 = sbr.rel (0) target = $region5
    $region4: #{tpu_custom_call.1} parent=1 // pred_region
      _
    $region5: #{tpu_custom_call.1} parent=1 // pred_fallthru
      _
    // Predicated region
    $region6: #{tpu_custom_call.1} parent=1 // pred_check
      _
    $region7: #{tpu_custom_call.1} parent=1 // pred_check_branch
      %16 = sbr.rel (0) target = $region9
    $region8: #{tpu_custom_call.1} parent=1 // pred_region
      _
    $region9: #{tpu_custom_call.1} parent=1 // pred_fallthru
      _
    // Predicated region
    $region10: #{tpu_custom_call.1} parent=1 // pred_check
      _
    $region11: #{tpu_custom_call.1} parent=1 // pred_check_branch
      %18 = sbr.rel (0) target = $region13
    $region12: #{tpu_custom_call.1} parent=1 // pred_region
      _
    $region13: #{tpu_custom_call.1} parent=1 // pred_fallthru
      _
    // Predicated region
    $region14: #{tpu_custom_call.1} parent=1 // pred_check
      _
    $region15: #{tpu_custom_call.1} parent=1 // pred_check_branch
      %20 = sbr.rel (0) target = $region17
    $region16: #{tpu_custom_call.1} parent=1 // pred_region
      _
    $region17: #{tpu_custom_call.1} parent=1 // pred_fallthru
      _
    // Predicated region
    $region18: #{tpu_custom_call.1} parent=1 // pred_check
      _
    $region19: #{tpu_custom_call.1} parent=1 // pred_check_branch
      %22 = sbr.rel (0) target = $region21
    $region20: #{tpu_custom_call.1} parent=1 // pred_region
      _
    $region21: #{tpu_custom_call.1} parent=1 // pred_fallthru
      _
    // Predicated region
    $region22: #{tpu_custom_call.1} parent=1 // pred_check
      _
    $region23: #{tpu_custom_call.1} parent=1 // pred_check_branch
      %24 = sbr.rel (0) target = $region25
    $region24: #{tpu_custom_call.1} parent=1 // pred_region
      _
    $region25: #{tpu_custom_call.1} parent=1 // pred_fallthru
      _
    %v26 = vld [vmem:[%s1] sm:$0xff]
    %v27 = vld [vmem:[%s1 + $0x8] sm:$0xff]
    %v28 = vld [vmem:[%s1 + $0x10] sm:$0xff]
    %v29 = vld [vmem:[%s1 + $0x18] sm:$0xf]
    %v30 = vld [vmem:[%s2] sm:$0xf]
    %v31 = vld [vmem:[%s2 + $0x4] sm:$0xf]
    %v32 = vld [vmem:[%s2 + $0x8] sm:$0xf]
    %v33 = vld [vmem:[%s2 + $0xc] sm:$0xf]
    %v34 = vld [vmem:[%s2 + $0x10] sm:$0xf]
    %v35 = vld [vmem:[%s2 + $0x14] sm:$0xf]
    %v36 = vld [vmem:[%s2 + $0x18] sm:$0xf]
    %v37 = vld [vmem:[%s2 + $0x1c] sm:$0xf]
    %v38 = vld [vmem:[%s2 + $0x20] sm:$0xf]
    %v39 = vld [vmem:[%s2 + $0x24] sm:$0xf]
    %v40 = vld [vmem:[%s2 + $0x28] sm:$0xf]
    %v41 = vld [vmem:[%s2 + $0x2c] sm:$0xf]
    %v42 = vld [vmem:[%s2 + $0x30] sm:$0xf]
    %v43 = vld [vmem:[%s2 + $0x34] sm:$0xf]
    %v44 = vld [vmem:[%s2 + $0x38] sm:$0xf]
    %v45 = vld [vmem:[%s2 + $0x3c] sm:$0xf]
    %v46 = vld [vmem:[%s2 + $0x40] sm:$0xf]
    %v47 = vld [vmem:[%s2 + $0x44] sm:$0xf]
    %v48 = vld [vmem:[%s2 + $0x48] sm:$0xf]
    %v49 = vld [vmem:[%s2 + $0x4c] sm:$0xf]
    %v50 = vld [vmem:[%s2 + $0x50] sm:$0xf]
    %v51 = vld [vmem:[%s2 + $0x54] sm:$0xf]
    %v52 = vld [vmem:[%s2 + $0x58] sm:$0xf]
    %v53 = vld [vmem:[%s2 + $0x5c] sm:$0xf]
    %v54 = vld [vmem:[%s2 + $0x60] sm:$0xf]
    %v55 = vld [vmem:[%s2 + $0x64] sm:$0xf]
    %v56 = vld [vmem:[%s2 + $0x68] sm:$0xf]
    %v57 = vld [vmem:[%s2 + $0x6c] sm:$0xf]
    %v58 = vld [vmem:[%s2 + $0x70] sm:$0xf]
    %v59 = vld [vmem:[%s2 + $0x74] sm:$0xf]
    %v60 = vld [vmem:[%s2 + $0x78] sm:$0xf]
    %v61 = vld [vmem:[%s2 + $0x7c] sm:$0xf]
    %v62 = vld [vmem:[%s2 + $0x80] sm:$0xf]
    %v63 = vld [vmem:[%s2 + $0x84] sm:$0xf]
    %v64 = vld [vmem:[%s2 + $0x88] sm:$0xf]
    %v65 = vld [vmem:[%s2 + $0x8c] sm:$0xf]
    %v66 = vld [vmem:[%s2 + $0x90] sm:$0xf]
    %v67 = vld [vmem:[%s2 + $0x94] sm:$0xf]
    %v68 = vld [vmem:[%s2 + $0x98] sm:$0xf]
    %v69 = vld [vmem:[%s2 + $0x9c] sm:$0xf]
    %v70 = vld [vmem:[%s2 + $0xa0] sm:$0xf]
    %v71 = vld [vmem:[%s2 + $0xa4] sm:$0xf]
    %v72 = vld [vmem:[%s2 + $0xa8] sm:$0xf]
    %v73 = vld [vmem:[%s2 + $0xac] sm:$0xf]
    %v74 = vld [vmem:[%s2 + $0xb0] sm:$0xf]
    %v75 = vld [vmem:[%s2 + $0xb4] sm:$0xf]
    %v76 = vld [vmem:[%s2 + $0xb8] sm:$0xf]
    %v77 = vld [vmem:[%s2 + $0xbc] sm:$0xf]
    %v78 = vld [vmem:[%s2 + $0xc0] sm:$0xf]
    %v79 = vld [vmem:[%s2 + $0xc4] sm:$0xf]
    %v80 = vld [vmem:[%s2 + $0xc8] sm:$0xf]
    %v81 = vld [vmem:[%s2 + $0xcc] sm:$0xf]
    %v82 = vld [vmem:[%s2 + $0xd0] sm:$0xf]
    %v83 = vld [vmem:[%s2 + $0xd4] sm:$0xf]
    %v84 = vld [vmem:[%s2 + $0xd8] sm:$0xf]
    %v85 = vld [vmem:[%s2 + $0xdc] sm:$0xf]
    %v86 = vld [vmem:[%s2 + $0xe0] sm:$0xf]
    %v87 = vld [vmem:[%s2 + $0xe4] sm:$0xf]
    %v88 = vld [vmem:[%s2 + $0xe8] sm:$0xf]
    %v89 = vld [vmem:[%s2 + $0xec] sm:$0xf]
    %v90 = vld [vmem:[%s2 + $0xf0] sm:$0xf]
    %v91 = vld [vmem:[%s2 + $0xf4] sm:$0xf]
    %v92 = vld [vmem:[%s2 + $0xf8] sm:$0xf]
    %v93 = vld [vmem:[%s2 + $0xfc] sm:$0xf]
    %v94 = vld [vmem:[%s2 + $0x100] sm:$0xf]
    %v95 = vld [vmem:[%s2 + $0x104] sm:$0xf]
    %v96 = vld [vmem:[%s2 + $0x108] sm:$0xf]
    %v97 = vld [vmem:[%s2 + $0x10c] sm:$0xf]
    %v98 = vld [vmem:[%s2 + $0x110] sm:$0xf]
    %v99 = vld [vmem:[%s2 + $0x114] sm:$0xf]
    %v100 = vld [vmem:[%s2 + $0x118] sm:$0xf]
    %v101 = vld [vmem:[%s2 + $0x11c] sm:$0xf]
    %v102 = vld [vmem:[%s2 + $0x120] sm:$0xf]
    %v103 = vld [vmem:[%s2 + $0x124] sm:$0xf]
    %v104 = vld [vmem:[%s2 + $0x128] sm:$0xf]
    %v105 = vld [vmem:[%s2 + $0x12c] sm:$0xf]
    %v106 = vld [vmem:[%s2 + $0x130] sm:$0xf]
    %v107 = vld [vmem:[%s2 + $0x134] sm:$0xf]
    %v108 = vld [vmem:[%s2 + $0x138] sm:$0xf]
    %v109 = vld [vmem:[%s2 + $0x13c] sm:$0xf]
    %v110 = vld [vmem:[%s2 + $0x140] sm:$0xf]
    %v111 = vld [vmem:[%s2 + $0x144] sm:$0xf]
    %v112 = vld [vmem:[%s2 + $0x148] sm:$0xf]
    %v113 = vld [vmem:[%s2 + $0x14c] sm:$0xf]
    %v114 = vld [vmem:[%s2 + $0x150] sm:$0xf]
    %v115 = vld [vmem:[%s2 + $0x154] sm:$0xf]
    %v116 = vld [vmem:[%s2 + $0x158] sm:$0xf]
    %v117 = vld [vmem:[%s2 + $0x15c] sm:$0xf]
    %v118 = vld [vmem:[%s2 + $0x160] sm:$0xf]
    %v119 = vld [vmem:[%s2 + $0x164] sm:$0xf]
    %v120 = vld [vmem:[%s2 + $0x168] sm:$0xf]
    %v121 = vld [vmem:[%s2 + $0x16c] sm:$0xf]
    %v122 = vld [vmem:[%s2 + $0x170] sm:$0xf]
    %v123 = vld [vmem:[%s2 + $0x174] sm:$0xf]
    %v124 = vld [vmem:[%s2 + $0x178] sm:$0xf]
    %v125 = vld [vmem:[%s2 + $0x17c] sm:$0xf]
    %v126 = vld [vmem:[%s2 + $0x180] sm:$0xf]
    %v127 = vld [vmem:[%s2 + $0x184] sm:$0xf]
    %v128 = vld [vmem:[%s3] sm:$0x1]
    %v130 = vlaneseq
    %v131 = vshrl.u32 %v130, 7
    %v132 = vsub.s32 0, %v131
    %v133 = vrot.slane %v128, %v132
    %v139 = vunpack.c.l.b16 %v26
    %v140 = vunpack.c.h.b16 %v26
    %v141 = vunpack.c.l.b16 %v27
    %v142 = vunpack.c.h.b16 %v27
    %v143 = vunpack.c.l.b16 %v28
    %v144 = vunpack.c.h.b16 %v28
    %v145 = vunpack.c.l.b16 %v29
    %v146 = vpack.c.b16 %v139, %v139
    %v147 = vpack.c.b16 %v140, %v140
    %v148 = vpack.c.b16 %v141, %v141
    %v149 = vpack.c.b16 %v142, %v142
    %v150 = vpack.c.b16 %v143, %v143
    %v151 = vpack.c.b16 %v144, %v144
    %v152 = vpack.c.b16 %v145, %v145
    %v257 = vunpack.c.l.b16 %v30
    %v258 = vunpack.c.l.b16 %v31
    %v259 = vunpack.c.l.b16 %v32
    %v260 = vunpack.c.l.b16 %v33
    %v261 = vunpack.c.l.b16 %v34
    %v262 = vunpack.c.l.b16 %v35
    %v263 = vunpack.c.l.b16 %v36
    %v264 = vunpack.c.l.b16 %v37
    %v265 = vunpack.c.l.b16 %v38
    %v266 = vunpack.c.l.b16 %v39
    %v267 = vunpack.c.l.b16 %v40
    %v268 = vunpack.c.l.b16 %v41
    %v269 = vunpack.c.l.b16 %v42
    %v270 = vunpack.c.l.b16 %v43
    %v271 = vunpack.c.l.b16 %v44
    %v272 = vunpack.c.l.b16 %v45
    %v273 = vunpack.c.l.b16 %v46
    %v274 = vunpack.c.l.b16 %v47
    %v275 = vunpack.c.l.b16 %v48
    %v276 = vunpack.c.l.b16 %v49
    %v277 = vunpack.c.l.b16 %v50
    %v278 = vunpack.c.l.b16 %v51
    %v279 = vunpack.c.l.b16 %v52
    %v280 = vunpack.c.l.b16 %v53
    %v281 = vunpack.c.l.b16 %v54
    %v282 = vunpack.c.l.b16 %v55
    %v283 = vunpack.c.l.b16 %v56
    %v284 = vunpack.c.l.b16 %v57
    %v285 = vunpack.c.l.b16 %v58
    %v286 = vunpack.c.l.b16 %v59
    %v287 = vunpack.c.l.b16 %v60
    %v288 = vunpack.c.l.b16 %v61
    %v289 = vunpack.c.l.b16 %v62
    %v290 = vunpack.c.l.b16 %v63
    %v291 = vunpack.c.l.b16 %v64
    %v292 = vunpack.c.l.b16 %v65
    %v293 = vunpack.c.l.b16 %v66
    %v294 = vunpack.c.l.b16 %v67
    %v295 = vunpack.c.l.b16 %v68
    %v296 = vunpack.c.l.b16 %v69
    %v297 = vunpack.c.l.b16 %v70
    %v298 = vunpack.c.l.b16 %v71
    %v299 = vunpack.c.l.b16 %v72
    %v300 = vunpack.c.l.b16 %v73
    %v301 = vunpack.c.l.b16 %v74
    %v302 = vunpack.c.l.b16 %v75
    %v303 = vunpack.c.l.b16 %v76
    %v304 = vunpack.c.l.b16 %v77
    %v305 = vunpack.c.l.b16 %v78
    %v306 = vunpack.c.l.b16 %v79
    %v307 = vunpack.c.l.b16 %v80
    %v308 = vunpack.c.l.b16 %v81
    %v309 = vunpack.c.l.b16 %v82
    %v310 = vunpack.c.l.b16 %v83
    %v311 = vunpack.c.l.b16 %v84
    %v312 = vunpack.c.l.b16 %v85
    %v313 = vunpack.c.l.b16 %v86
    %v314 = vunpack.c.l.b16 %v87
    %v315 = vunpack.c.l.b16 %v88
    %v316 = vunpack.c.l.b16 %v89
    %v317 = vunpack.c.l.b16 %v90
    %v318 = vunpack.c.l.b16 %v91
    %v319 = vunpack.c.l.b16 %v92
    %v320 = vunpack.c.l.b16 %v93
    %v321 = vunpack.c.l.b16 %v94
    %v322 = vunpack.c.l.b16 %v95
    %v323 = vunpack.c.l.b16 %v96
    %v324 = vunpack.c.l.b16 %v97
    %v325 = vunpack.c.l.b16 %v98
    %v326 = vunpack.c.l.b16 %v99
    %v327 = vunpack.c.l.b16 %v100
    %v328 = vunpack.c.l.b16 %v101
    %v329 = vunpack.c.l.b16 %v102
    %v330 = vunpack.c.l.b16 %v103
    %v331 = vunpack.c.l.b16 %v104
    %v332 = vunpack.c.l.b16 %v105
    %v333 = vunpack.c.l.b16 %v106
    %v334 = vunpack.c.l.b16 %v107
    %v335 = vunpack.c.l.b16 %v108
    %v336 = vunpack.c.l.b16 %v109
    %v337 = vunpack.c.l.b16 %v110
    %v338 = vunpack.c.l.b16 %v111
    %v339 = vunpack.c.l.b16 %v112
    %v340 = vunpack.c.l.b16 %v113
    %v341 = vunpack.c.l.b16 %v114
    %v342 = vunpack.c.l.b16 %v115
    %v343 = vunpack.c.l.b16 %v116
    %v344 = vunpack.c.l.b16 %v117
    %v345 = vunpack.c.l.b16 %v118
    %v346 = vunpack.c.l.b16 %v119
    %v347 = vunpack.c.l.b16 %v120
    %v348 = vunpack.c.l.b16 %v121
    %v349 = vunpack.c.l.b16 %v122
    %v350 = vunpack.c.l.b16 %v123
    %v351 = vunpack.c.l.b16 %v124
    %v352 = vunpack.c.l.b16 %v125
    %v353 = vunpack.c.l.b16 %v126
    %v354 = vunpack.c.l.b16 %v127
    %v355 = vpack.c.b16 %v258, %v257
    %v356 = vpack.c.b16 %v260, %v259
    %v357 = vpack.c.b16 %v262, %v261
    %v358 = vpack.c.b16 %v264, %v263
    %v359 = vpack.c.b16 %v266, %v265
    %v360 = vpack.c.b16 %v268, %v267
    %v361 = vpack.c.b16 %v270, %v269
    %v362 = vpack.c.b16 %v272, %v271
    %v363 = vpack.c.b16 %v274, %v273
    %v364 = vpack.c.b16 %v276, %v275
    %v365 = vpack.c.b16 %v278, %v277
    %v366 = vpack.c.b16 %v280, %v279
    %v367 = vpack.c.b16 %v282, %v281
    %v368 = vpack.c.b16 %v284, %v283
    %v369 = vpack.c.b16 %v286, %v285
    %v370 = vpack.c.b16 %v288, %v287
    %v371 = vpack.c.b16 %v290, %v289
    %v372 = vpack.c.b16 %v292, %v291
    %v373 = vpack.c.b16 %v294, %v293
    %v374 = vpack.c.b16 %v296, %v295
    %v375 = vpack.c.b16 %v298, %v297
    %v376 = vpack.c.b16 %v300, %v299
    %v377 = vpack.c.b16 %v302, %v301
    %v378 = vpack.c.b16 %v304, %v303
    %v379 = vpack.c.b16 %v306, %v305
    %v380 = vpack.c.b16 %v308, %v307
    %v381 = vpack.c.b16 %v310, %v309
    %v382 = vpack.c.b16 %v312, %v311
    %v383 = vpack.c.b16 %v314, %v313
    %v384 = vpack.c.b16 %v316, %v315
    %v385 = vpack.c.b16 %v318, %v317
    %v386 = vpack.c.b16 %v320, %v319
    %v387 = vpack.c.b16 %v322, %v321
    %v388 = vpack.c.b16 %v324, %v323
    %v389 = vpack.c.b16 %v326, %v325
    %v390 = vpack.c.b16 %v328, %v327
    %v391 = vpack.c.b16 %v330, %v329
    %v392 = vpack.c.b16 %v332, %v331
    %v393 = vpack.c.b16 %v334, %v333
    %v394 = vpack.c.b16 %v336, %v335
    %v395 = vpack.c.b16 %v338, %v337
    %v396 = vpack.c.b16 %v340, %v339
    %v397 = vpack.c.b16 %v342, %v341
    %v398 = vpack.c.b16 %v344, %v343
    %v399 = vpack.c.b16 %v346, %v345
    %v400 = vpack.c.b16 %v348, %v347
    %v401 = vpack.c.b16 %v350, %v349
    %v402 = vpack.c.b16 %v352, %v351
    %v403 = vpack.c.b16 %v354, %v353
    %vm453 = vcmask 130048
    %v455 = vsel %vm453, %v152, 0
    %457 = vmatprep.subr.bf16.mxu0 0
    %458 = vmatpush1.bf16.msra.mxu0 %v362
    %459 = vmatprep.subr.bf16.mxu0 0
    %460 = vmatpush1.bf16.msra.mxu0 %v361
    %461 = vmatprep.subr.bf16.mxu0 0
    %462 = vmatpush1.bf16.msra.mxu0 %v360
    %463 = vmatprep.subr.bf16.mxu0 0
    %464 = vmatpush1.bf16.msra.mxu0 %v359
    %465 = vmatprep.subr.bf16.mxu0 0
    %466 = vmatpush1.bf16.msra.mxu0 %v358
    %467 = vmatprep.subr.bf16.mxu0 0
    %468 = vmatpush1.bf16.msra.mxu0 %v357
    %469 = vmatprep.subr.bf16.mxu0 0
    %470 = vmatpush1.bf16.msra.mxu0 %v356
    %471 = vmatprep.subr.bf16.mxu0 0
    %472 = vmatpush1.bf16.msra.mxu0 %v355
    %473 = vmatprep.subr.bf16.mxu0 0
    %474 = vmatpush2.bf16.msra.mxu0 %v370
    %475 = vmatprep.subr.bf16.mxu0 0
    %476 = vmatpush2.bf16.msra.mxu0 %v369
    %477 = vmatprep.subr.bf16.mxu0 0
    %478 = vmatpush2.bf16.msra.mxu0 %v368
    %479 = vmatprep.subr.bf16.mxu0 0
    %480 = vmatpush2.bf16.msra.mxu0 %v367
    %481 = vmatprep.subr.bf16.mxu0 0
    %482 = vmatpush2.bf16.msra.mxu0 %v366
    %483 = vmatprep.subr.bf16.mxu0 0
    %484 = vmatpush2.bf16.msra.mxu0 %v365
    %485 = vmatprep.subr.bf16.mxu0 0
    %486 = vmatpush2.bf16.msra.mxu0 %v364
    %487 = vmatprep.subr.bf16.mxu0 0
    %488 = vmatpush2.bf16.msra.mxu0 %v363
    %489 = vmatprep.mubr.bf16.mxu0 %v147
    %490 = vmatmul.mubr.bf16.gmra.mxu0 %v146
    %v491 = vpop.f32.mrf.mxu0
    %v492 = vadd.f32 %v133, %v491
    %v493 = vpop.f32.mrf.mxu0
    %v494 = vpop.f32.mrf.mxu0
    %v495 = vpop.f32.mrf.mxu0
    %496 = vdwg.mxu0
    %497 = vmatprep.subr.bf16.mxu0 0
    %498 = vmatpush1.bf16.msra.mxu0 %v378
    %499 = vmatprep.subr.bf16.mxu0 0
    %500 = vmatpush1.bf16.msra.mxu0 %v377
    %501 = vmatprep.subr.bf16.mxu0 0
    %502 = vmatpush1.bf16.msra.mxu0 %v376
    %503 = vmatprep.subr.bf16.mxu0 0
    %504 = vmatpush1.bf16.msra.mxu0 %v375
    %505 = vmatprep.subr.bf16.mxu0 0
    %506 = vmatpush1.bf16.msra.mxu0 %v374
    %507 = vmatprep.subr.bf16.mxu0 0
    %508 = vmatpush1.bf16.msra.mxu0 %v373
    %509 = vmatprep.subr.bf16.mxu0 0
    %510 = vmatpush1.bf16.msra.mxu0 %v372
    %511 = vmatprep.subr.bf16.mxu0 0
    %512 = vmatpush1.bf16.msra.mxu0 %v371
    %513 = vmatprep.subr.bf16.mxu0 0
    %514 = vmatpush2.bf16.msra.mxu0 %v386
    %515 = vmatprep.subr.bf16.mxu0 0
    %516 = vmatpush2.bf16.msra.mxu0 %v385
    %517 = vmatprep.subr.bf16.mxu0 0
    %518 = vmatpush2.bf16.msra.mxu0 %v384
    %519 = vmatprep.subr.bf16.mxu0 0
    %520 = vmatpush2.bf16.msra.mxu0 %v383
    %521 = vmatprep.subr.bf16.mxu0 0
    %522 = vmatpush2.bf16.msra.mxu0 %v382
    %523 = vmatprep.subr.bf16.mxu0 0
    %524 = vmatpush2.bf16.msra.mxu0 %v381
    %525 = vmatprep.subr.bf16.mxu0 0
    %526 = vmatpush2.bf16.msra.mxu0 %v380
    %527 = vmatprep.subr.bf16.mxu0 0
    %528 = vmatpush2.bf16.msra.mxu0 %v379
    %529 = vmatprep.mubr.bf16.mxu0 %v149
    %530 = vmatmul.mubr.bf16.gmra.mxu0 %v148
    %v531 = vpop.f32.mrf.mxu0
    %v532 = vadd.f32 %v492, %v531
    %v533 = vpop.f32.mrf.mxu0
    %v534 = vpop.f32.mrf.mxu0
    %v535 = vpop.f32.mrf.mxu0
    %536 = vdwg.mxu0
    %537 = vmatprep.subr.bf16.mxu0 0
    %538 = vmatpush1.bf16.msra.mxu0 %v394
    %539 = vmatprep.subr.bf16.mxu0 0
    %540 = vmatpush1.bf16.msra.mxu0 %v393
    %541 = vmatprep.subr.bf16.mxu0 0
    %542 = vmatpush1.bf16.msra.mxu0 %v392
    %543 = vmatprep.subr.bf16.mxu0 0
    %544 = vmatpush1.bf16.msra.mxu0 %v391
    %545 = vmatprep.subr.bf16.mxu0 0
    %546 = vmatpush1.bf16.msra.mxu0 %v390
    %547 = vmatprep.subr.bf16.mxu0 0
    %548 = vmatpush1.bf16.msra.mxu0 %v389
    %549 = vmatprep.subr.bf16.mxu0 0
    %550 = vmatpush1.bf16.msra.mxu0 %v388
    %551 = vmatprep.subr.bf16.mxu0 0
    %552 = vmatpush1.bf16.msra.mxu0 %v387
    %553 = vmatprep.subr.bf16.mxu0 0
    %554 = vmatpush2.bf16.msra.mxu0 %v402
    %555 = vmatprep.subr.bf16.mxu0 0
    %556 = vmatpush2.bf16.msra.mxu0 %v401
    %557 = vmatprep.subr.bf16.mxu0 0
    %558 = vmatpush2.bf16.msra.mxu0 %v400
    %559 = vmatprep.subr.bf16.mxu0 0
    %560 = vmatpush2.bf16.msra.mxu0 %v399
    %561 = vmatprep.subr.bf16.mxu0 0
    %562 = vmatpush2.bf16.msra.mxu0 %v398
    %563 = vmatprep.subr.bf16.mxu0 0
    %564 = vmatpush2.bf16.msra.mxu0 %v397
    %565 = vmatprep.subr.bf16.mxu0 0
    %566 = vmatpush2.bf16.msra.mxu0 %v396
    %567 = vmatprep.subr.bf16.mxu0 0
    %568 = vmatpush2.bf16.msra.mxu0 %v395
    %569 = vmatprep.mubr.bf16.mxu0 %v151
    %570 = vmatmul.mubr.bf16.gmra.mxu0 %v150
    %v571 = vpop.f32.mrf.mxu0
    %v572 = vadd.f32 %v532, %v571
    %v573 = vpop.f32.mrf.mxu0
    %v574 = vpop.f32.mrf.mxu0
    %v575 = vpop.f32.mrf.mxu0
    %576 = vdwg.mxu0
    %577 = vmatprep.subr.bf16.mxu0 0
    %578 = vmatpush1.bf16.msra.mxu0 0
    %579 = vmatprep.subr.bf16.mxu0 0
    %580 = vmatpush1.bf16.msra.mxu0 0
    %581 = vmatprep.subr.bf16.mxu0 0
    %582 = vmatpush1.bf16.msra.mxu0 0
    %583 = vmatprep.subr.bf16.mxu0 0
    %584 = vmatpush1.bf16.msra.mxu0 0
    %585 = vmatprep.subr.bf16.mxu0 0
    %586 = vmatpush1.bf16.msra.mxu0 0
    %587 = vmatprep.subr.bf16.mxu0 0
    %588 = vmatpush1.bf16.msra.mxu0 0
    %589 = vmatprep.subr.bf16.mxu0 0
    %590 = vmatpush1.bf16.msra.mxu0 0
    %591 = vmatprep.subr.bf16.mxu0 0
    %592 = vmatpush1.bf16.msra.mxu0 %v403
    %593 = vmatprep.subr.bf16.mxu0 0
    %594 = vmatpush2.bf16.msra.mxu0 0
    %595 = vmatprep.subr.bf16.mxu0 0
    %596 = vmatpush2.bf16.msra.mxu0 0
    %597 = vmatprep.subr.bf16.mxu0 0
    %598 = vmatpush2.bf16.msra.mxu0 0
    %599 = vmatprep.subr.bf16.mxu0 0
    %600 = vmatpush2.bf16.msra.mxu0 0
    %601 = vmatprep.subr.bf16.mxu0 0
    %602 = vmatpush2.bf16.msra.mxu0 0
    %603 = vmatprep.subr.bf16.mxu0 0
    %604 = vmatpush2.bf16.msra.mxu0 0
    %605 = vmatprep.subr.bf16.mxu0 0
    %606 = vmatpush2.bf16.msra.mxu0 0
    %607 = vmatprep.subr.bf16.mxu0 0
    %608 = vmatpush2.bf16.msra.mxu0 0
    %609 = vmatprep.mubr.bf16.mxu0 0
    %610 = vmatmul.mubr.bf16.gmra.mxu0 %v455
    %v611 = vpop.f32.mrf.mxu0
    %v612 = vadd.f32 %v572, %v611
    %v613 = vpop.f32.mrf.mxu0
    %v614 = vpop.f32.mrf.mxu0
    %v615 = vpop.f32.mrf.mxu0
    %616 = vdwg.mxu0
    %v617 = vmax.f32 %v612, 0.0
    %v618 = vlaneseq
    %v619 = vshrl.u32 %v618, 7
    %s620 = smul.u32 0, 8
    %v621 = vstv %s620
    %v622 = vadd.s32 %v619, %v621
    %v623 = vlaneseq
    %v624 = vand.u32 %v623, 127
    %v625 = vmul.u32 %v622, 48
    %v626 = vadd.s32 %v625, %v624
    %s627 = sld [smem:[#allocation2]]
    %s628 = smul.u32 %s627, 2654435769
    %v629 = vstv %s628
    %v630 = vadd.s32 %v626, %v629
    %v631 = vshrl.u32 %v630, 16
    %v632 = vxor.u32 %v630, %v631
    %v633 = vmul.u32 %v632, 2146121005
    %v634 = vshrl.u32 %v633, 15
    %v635 = vxor.u32 %v633, %v634
    %v636 = vmul.u32 %v635, 2221713035
    %v637 = vshrl.u32 %v636, 16
    %v638 = vxor.u32 %v636, %v637
    %v639 = vshrl.u32 %v638, 8
    %vm640 = vcmp.ge.s32.totalorder %v639, 3355443
    %v641 = vmul.f32 %v617, 1.25
    %v642 = vsel %vm640, %v641, 0.0
    %v643 = vpack.c.bf16 %v642, %v642
    %v644 = vld [vmem:[%s4] sm:$0xf]
    %v645 = vld [vmem:[%s4 + $0x4] sm:$0xf]
    %v646 = vld [vmem:[%s4 + $0x8] sm:$0xf]
    %v647 = vld [vmem:[%s4 + $0xc] sm:$0xf]
    %v648 = vld [vmem:[%s4 + $0x10] sm:$0xf]
    %v649 = vld [vmem:[%s4 + $0x14] sm:$0xf]
    %v650 = vld [vmem:[%s5] sm:$0x1]
    %v652 = vlaneseq
    %v653 = vshrl.u32 %v652, 7
    %v654 = vsub.s32 0, %v653
    %v655 = vrot.slane %v650, %v654
    %v663 = vunpack.c.l.b16 %v644
    %v664 = vunpack.c.l.b16 %v645
    %v665 = vunpack.c.l.b16 %v646
    %v666 = vunpack.c.l.b16 %v647
    %v667 = vunpack.c.l.b16 %v648
    %v668 = vunpack.c.l.b16 %v649
    %v669 = vpack.c.b16 %v664, %v663
    %v670 = vpack.c.b16 %v666, %v665
    %v671 = vpack.c.b16 %v668, %v667
    %vm675 = vcmask 392192
    %v677 = vsel %vm675, %v643, 0
    %679 = vmatprep.subr.bf16.mxu0 0
    %680 = vmatpush1.bf16.msra.mxu0 0
    %681 = vmatprep.subr.bf16.mxu0 0
    %682 = vmatpush1.bf16.msra.mxu0 0
    %683 = vmatprep.subr.bf16.mxu0 0
    %684 = vmatpush1.bf16.msra.mxu0 0
    %685 = vmatprep.subr.bf16.mxu0 0
    %686 = vmatpush1.bf16.msra.mxu0 0
    %687 = vmatprep.subr.bf16.mxu0 0
    %688 = vmatpush1.bf16.msra.mxu0 0
    %689 = vmatprep.subr.bf16.mxu0 0
    %690 = vmatpush1.bf16.msra.mxu0 %v671
    %691 = vmatprep.subr.bf16.mxu0 0
    %692 = vmatpush1.bf16.msra.mxu0 %v670
    %693 = vmatprep.subr.bf16.mxu0 0
    %694 = vmatpush1.bf16.msra.mxu0 %v669
    %695 = vmatprep.subr.bf16.mxu0 0
    %696 = vmatpush2.bf16.msra.mxu0 0
    %697 = vmatprep.subr.bf16.mxu0 0
    %698 = vmatpush2.bf16.msra.mxu0 0
    %699 = vmatprep.subr.bf16.mxu0 0
    %700 = vmatpush2.bf16.msra.mxu0 0
    %701 = vmatprep.subr.bf16.mxu0 0
    %702 = vmatpush2.bf16.msra.mxu0 0
    %703 = vmatprep.subr.bf16.mxu0 0
    %704 = vmatpush2.bf16.msra.mxu0 0
    %705 = vmatprep.subr.bf16.mxu0 0
    %706 = vmatpush2.bf16.msra.mxu0 0
    %707 = vmatprep.subr.bf16.mxu0 0
    %708 = vmatpush2.bf16.msra.mxu0 0
    %709 = vmatprep.subr.bf16.mxu0 0
    %710 = vmatpush2.bf16.msra.mxu0 0
    %711 = vmatprep.mubr.bf16.mxu0 0
    %712 = vmatmul.mubr.bf16.gmra.mxu0 %v677
    %v713 = vpop.f32.mrf.mxu0
    %v714 = vadd.f32 %v655, %v713
    %v715 = vpop.f32.mrf.mxu0
    %v716 = vpop.f32.mrf.mxu0
    %v717 = vpop.f32.mrf.mxu0
    %718 = vdwg.mxu0
    %vm719 = vcmask 80896
    %720 = vst.msk [vmem:[#allocation3] sm:$0xff] %vm719, %v714
    // Predicated region
    $region26: #{tpu_custom_call.1} parent=1 // pred_check
      _
    $region27: #{tpu_custom_call.1} parent=1 // pred_check_branch
      %722 = sbr.rel (0) target = $region29
    $region28: #{tpu_custom_call.1} parent=1 // pred_region
      %s724 = ssub.s32 128, 128
      %725 = vsyncadd [#allocation4], %s724
      %s727 = sshll.u32 [#allocation3], 4
      %s728 = int_to_ptr.vmem [resolvable:$true] %s727
      %730 = dma.vmem_to_hbm [thread:$0]  %s728, 128, %s6, [#allocation4]
    $region29: #{tpu_custom_call.1} parent=1 // pred_fallthru
      _
    // Predicated region
    $region30: #{tpu_custom_call.1} parent=1 // pred_check
      _
    $region31: #{tpu_custom_call.1} parent=1 // pred_check_branch
      %732 = sbr.rel (0) target = $region33
    $region32: #{tpu_custom_call.1} parent=1 // pred_region
      %733 = dma.done [#allocation4], 128
    $region33: #{tpu_custom_call.1} parent=1 // pred_fallthru
      _
    %734 = vsyncpa [#allocation4], 1

</llo_original>
